<compile_context>
chip_gen: v7x
topology: tpu7x:2x2x1
jax: 0.10.0
libtpu: 0.0.40
codegen_flags: <defaults>
</compile_context>

<pallas_src>
import jax
import jax.numpy as jnp
from jax.experimental import pallas as pl
from jax.experimental.pallas import tpu as pltpu


# -----------------------------------------------------------------------------
# Kernel 1: the recurrent part. Single grid step; T is looped inside the kernel.
# Emits one lane-dense packed record per step: [h_top | ctx | emb | attw | pad]
# in final [B, T, P] layout (P = 128-multiple).
# -----------------------------------------------------------------------------
def _recurrent_kernel(emb_ref, enc_ref, mask_ref, h0_ref, c0_ref, kpre_ref,
                      w0_ref, b0_ref, w1_ref, b1_ref,
                      pack_ref, h_s, c_s):
    B, T, E = emb_ref.shape
    _, S, I = enc_ref.shape
    H = h0_ref.shape[2]
    P = pack_ref.shape[2]
    H4 = 4 * H

    # LSTM state lives in VMEM scratch across the in-kernel time loop.
    h_s[...] = h0_ref[...]
    c_s[...] = c0_ref[...]

    # Loop-invariant hoists (JAX does not CSE broadcast_in_dim -> pre-broadcast once).
    # TODO(synk): at production S_enc keep enc/kpre as refs indexed per step (or stream
    #             S tiles) instead of hoisting into SSA values (v7x 64 MiB VMEM).
    enc = enc_ref[...]                                        # [B, S, I]
    kpre = kpre_ref[...]                                      # [B, S, H] precomputed keys
    w0 = w0_ref[...]                                          # [E+I+H, 4H] fused layer-0
    w1 = w1_ref[...]                                          # [2H,    4H] fused layer-1
    b0 = jnp.broadcast_to(b0_ref[...], (B, H4))               # [B, 4H]
    b1 = jnp.broadcast_to(b1_ref[...], (B, H4))               # [B, 4H]
    mask_bias = jnp.where(mask_ref[...] > 0.0, 0.0, -1e30)    # [B, S]
    pad_w = P - (H + I + E + S)
    pad_pieces = [jnp.zeros((B, pad_w), jnp.float32)] if pad_w > 0 else []

    @pl.loop(0, T)
    def _step(t):
        h_prev0 = h_s[0]                                      # [B, H]
        h_prev1 = h_s[1]                                      # [B, H]

        # ---- Attention (Luong "general") on top-layer state; VPU+XLU path ------
        # (small S_enc regime; keys are precomputed so no per-step q matmul).
        # TODO(synk): production S_enc -> S-tiled MXU scores + online softmax.
        scores = jnp.sum(h_prev1[:, None, :] * kpre, axis=-1) + mask_bias  # [B, S]
        m = jnp.max(scores, axis=-1, keepdims=True)
        p = jnp.exp(scores - m)
        # max-subtraction guarantees denom >= 1 -> approx reciprocal (EUP) is safe.
        w = p * pl.reciprocal(jnp.sum(p, axis=-1, keepdims=True), approx=True)
        ctx = jnp.sum(w[:, :, None] * enc, axis=1)                         # [B, I]

        emb = emb_ref[:, pl.ds(t, 1), :][:, 0, :]                          # [B, E]

        # ---- LSTM layer 0: ONE fused matmul over [emb | ctx | h_prev0] ---------
        x0 = jnp.concatenate([emb, ctx, h_prev0], axis=-1)                 # [B, E+I+H]
        g0 = jnp.dot(x0, w0, preferred_element_type=jnp.float32) + b0      # [B, 4H]
        sg0 = jax.nn.sigmoid(g0)        # one full-vreg EUP push (i, f, o lanes used)
        th0 = jnp.tanh(g0)              # one full-vreg EUP push (g lanes used)
        c0n = sg0[:, H:2 * H] * c_s[0] + sg0[:, 0:H] * th0[:, 2 * H:3 * H]
        h0n = sg0[:, 3 * H:4 * H] * jnp.tanh(c0n)

        # ---- LSTM layer 1: ONE fused matmul over [h0n | h_prev1] ---------------
        x1 = jnp.concatenate([h0n, h_prev1], axis=-1)                      # [B, 2H]
        g1 = jnp.dot(x1, w1, preferred_element_type=jnp.float32) + b1      # [B, 4H]
        sg1 = jax.nn.sigmoid(g1)
        th1 = jnp.tanh(g1)
        c1n = sg1[:, H:2 * H] * c_s[1] + sg1[:, 0:H] * th1[:, 2 * H:3 * H]
        h1n = sg1[:, 3 * H:4 * H] * jnp.tanh(c1n)

        h_s[0] = h0n
        c_s[0] = c0n
        h_s[1] = h1n
        c_s[1] = c1n

        # ---- One lane-dense store per step, directly in [B, T, *] layout -------
        packed = jnp.concatenate([h1n, ctx, emb, w] + pad_pieces, axis=-1)  # [B, P]
        pack_ref[:, pl.ds(t, 1), :] = packed[:, None, :]


# -----------------------------------------------------------------------------
# Kernel 2: hoisted output projection over all B*T rows at once.
#   logits = tanh(pack @ wo_pack + bo) @ ws + bs
# wo_pack rows are laid out [h | ctx | emb | zeros], so no concat is materialized.
# TODO(synk): at production V tile over (row tiles, 128-multiple V tiles) with a real
#             grid (parallel, parallel), double-buffered ws tiles, bf16 operands.
# -----------------------------------------------------------------------------
def _projection_kernel(x_ref, wo_ref, bo_ref, ws_ref, bs_ref, out_ref):
    lin = (jnp.dot(x_ref[...], wo_ref[...], preferred_element_type=jnp.float32)
           + bo_ref[...])
    out_ref[...] = (jnp.dot(jnp.tanh(lin), ws_ref[...],
                            preferred_element_type=jnp.float32) + bs_ref[...])


def _full_spec(shape):
    n = len(shape)
    return pl.BlockSpec(shape, lambda i, n=n: (0,) * n)


@jax.jit
def decoder_forward(params, y_tokens, enc_output, mask, h0, c0):
    B, S, I = enc_output.shape
    L, _, H = h0.shape
    V, E = params["embedding"].shape
    inter = params["bo"].shape[-1]
    T = y_tokens.shape[1] - 1                                  # seq_len_dec - 1
    Din = H + I + E
    P = ((Din + S + 127) // 128) * 128                         # packed lane width

    # Teacher-forcing embeddings, already in [B, T, E] (no wrapper transposes).
    emb_bte = params["embedding"][y_tokens[:, :T]]
    # Attention keys precomputed once: scores_t[b,s] = h_top[b] . kpre[b,s].
    kpre = jnp.einsum("bsi,hi->bsh", enc_output, params["wa_t"])           # [B, S, H]

    pack = pl.pallas_call(
        _recurrent_kernel,
        out_shape=jax.ShapeDtypeStruct((B, T, P), jnp.float32),
        grid=(1,),
        in_specs=[
            _full_spec((B, T, E)),            # emb_bte
            _full_spec((B, S, I)),            # enc_output
            _full_spec((B, S)),               # mask
            _full_spec((L, B, H)),            # h0
            _full_spec((L, B, H)),            # c0
            _full_spec((B, S, H)),            # kpre
            _full_spec((E + I + H, 4 * H)),   # w0 (fused [emb|ctx|h] -> 4H)
            _full_spec((1, 4 * H)),           # b0
            _full_spec((2 * H, 4 * H)),       # w1 (fused [h0|h1] -> 4H)
            _full_spec((1, 4 * H)),           # b1
        ],
        out_specs=_full_spec((B, T, P)),
        scratch_shapes=[pltpu.VMEM((L, B, H), jnp.float32),
                        pltpu.VMEM((L, B, H), jnp.float32)],
        compiler_params=pltpu.CompilerParams(
            dimension_semantics=("arbitrary",)),
    )(emb_bte, enc_output, mask, h0, c0, kpre,
      params["w0"], params["b0"], params["w1"], params["b1"])

    # Hoisted projection consumes the packed record directly (no concat, no transpose).
    x = pack.reshape(B * T, P)
    wo_pack = jnp.concatenate(
        [params["wo"], jnp.zeros((P - Din, inter), params["wo"].dtype)], axis=0)
    logits = pl.pallas_call(
        _projection_kernel,
        out_shape=jax.ShapeDtypeStruct((B * T, V), jnp.float32),
        grid=(1,),
        in_specs=[_full_spec((B * T, P)),
                  _full_spec((P, inter)),
                  _full_spec((1, inter)),
                  _full_spec((inter, V)),
                  _full_spec((1, V))],
        out_specs=_full_spec((B * T, V)),
        compiler_params=pltpu.CompilerParams(
            dimension_semantics=("arbitrary",)),
    )(x, wo_pack, params["bo"], params["ws"], params["bs"])

    output = logits.reshape(B, T, V)                       # already [B, T, V]
    attention_weights = pack[:, :, Din:Din + S]            # already [B, T, S]
    return output, attention_weights


# -----------------------------------------------------------------------------
# Deterministic synthetic parameter init (shapes follow the module's __init__).
# LSTM weights stored pre-fused: w0 = [W_ih(emb rows); W_ih(ctx rows); W_hh] of layer 0,
# w1 = [W_ih; W_hh] of layer 1, gate order i,f,g,o along the 4H axis, b_ih+b_hh combined.
# output_linear stored as one [H+I+E, inter] matrix matching cat(dec_out, ctx, emb).
# -----------------------------------------------------------------------------
def init_params(key, E, I, H, V):
    inter = int((H + I + E + V) * 2)
    ks = jax.random.split(key, 10)

    def u(k, shape, fan):
        bound = 1.0 / jnp.sqrt(jnp.float32(fan))
        return jax.random.uniform(k, shape, jnp.float32, -bound, bound)

    return dict(
        embedding=u(ks[0], (V, E), E),
        wa_t=u(ks[1], (H, I), H),                       # attention Linear(H, I), transposed
        w0=u(ks[2], (E + I + H, 4 * H), H),             # fused layer-0 input weights
        b0=u(ks[3], (1, 4 * H), H),
        w1=u(ks[4], (2 * H, 4 * H), H),                 # fused layer-1 input weights
        b1=u(ks[5], (1, 4 * H), H),
        wo=u(ks[6], (H + I + E, inter), H + I + E),     # output_linear
        bo=u(ks[7], (1, inter), H + I + E),
        ws=u(ks[8], (inter, V), inter),                 # softmax_linear
        bs=u(ks[9], (1, V), inter),
    )


# -----------------------------------------------------------------------------
# Pure-JAX reference for correctness checking (same fused-weight parameterization).
# -----------------------------------------------------------------------------
def reference_decoder(params, emb_bte, enc, mask, h0, c0):
    B, T, E = emb_bte.shape
    H = h0.shape[-1]
    h, c = h0, c0
    outs, atts = [], []
    for t in range(T):
        q = h[1] @ params["wa_t"]                              # [B, I]
        scores = jnp.einsum("bi,bsi->bs", q, enc)
        scores = jnp.where(mask > 0.0, scores, -1e30)
        w = jax.nn.softmax(scores, axis=-1)
        ctx = jnp.einsum("bs,bsi->bi", w, enc)
        emb = emb_bte[:, t]

        x0 = jnp.concatenate([emb, ctx, h[0]], axis=-1)
        g0 = x0 @ params["w0"] + params["b0"]
        i0, f0 = jax.nn.sigmoid(g0[:, :H]), jax.nn.sigmoid(g0[:, H:2 * H])
        gg0, o0 = jnp.tanh(g0[:, 2 * H:3 * H]), jax.nn.sigmoid(g0[:, 3 * H:])
        c0n = f0 * c[0] + i0 * gg0
        h0n = o0 * jnp.tanh(c0n)

        x1 = jnp.concatenate([h0n, h[1]], axis=-1)
        g1 = x1 @ params["w1"] + params["b1"]
        i1, f1 = jax.nn.sigmoid(g1[:, :H]), jax.nn.sigmoid(g1[:, H:2 * H])
        gg1, o1 = jnp.tanh(g1[:, 2 * H:3 * H]), jax.nn.sigmoid(g1[:, 3 * H:])
        c1n = f1 * c[1] + i1 * gg1
        h1n = o1 * jnp.tanh(c1n)

        h = jnp.stack([h0n, h1n])
        c = jnp.stack([c0n, c1n])

        lin = jnp.concatenate([h1n, ctx, emb], axis=-1) @ params["wo"] + params["bo"]
        logits = jnp.tanh(lin) @ params["ws"] + params["bs"]
        outs.append(logits)
        atts.append(w)
    return jnp.stack(outs, axis=1), jnp.stack(atts, axis=1)


if __name__ == "__main__":
    # Small shapes consistent with the module's forward. H=32 -> 4H=128 lanes.
    B, S_enc, T_dec = 2, 8, 6
    E, I, H, L, V = 16, 24, 32, 2, 40

    key = jax.random.PRNGKey(0)
    kp, k1, k2, k3, k4 = jax.random.split(key, 5)

    params = init_params(kp, E, I, H, V)
    y_tokens = jax.random.randint(k1, (B, T_dec), 0, V)                 # target ids
    enc_output = jax.random.normal(k2, (B, S_enc, I), jnp.float32)
    lengths = jnp.array([S_enc, 6], dtype=jnp.int32)
    encoder_mask = (jnp.arange(S_enc)[None, :] < lengths[:, None]).astype(jnp.float32)
    h0 = 0.1 * jax.random.normal(k3, (L, B, H), jnp.float32)
    c0 = 0.1 * jax.random.normal(k4, (L, B, H), jnp.float32)

    output, attention_weights = decoder_forward(
        params, y_tokens, enc_output, encoder_mask, h0, c0)
    output = jax.block_until_ready(output)
    attention_weights = jax.block_until_ready(attention_weights)

    # Sanity check against the pure-JAX reference.
    emb_bte = params["embedding"][y_tokens[:, :T_dec - 1]]
    ref_out, ref_attw = reference_decoder(params, emb_bte, enc_output,
                                          encoder_mask, h0, c0)
    assert output.shape == (B, T_dec - 1, V)
    assert attention_weights.shape == (B, T_dec - 1, S_enc)
    assert jnp.allclose(output, ref_out, atol=3e-2, rtol=3e-2), \
        f"max |d_out| = {float(jnp.max(jnp.abs(output - ref_out)))}"
    assert jnp.allclose(attention_weights, ref_attw, atol=1e-2, rtol=1e-2), \
        f"max |d_attw| = {float(jnp.max(jnp.abs(attention_weights - ref_attw)))}"

    print("KERNEL_OK")
</pallas_src>

<mosaic_0001>
module attributes {stable_mosaic.version = 11 : i64} {
  func.func @_recurrent_kernel(%arg0: i32, %arg1: memref<2x5x16xf32, #tpu.memory_space<vmem>>, %arg2: memref<2x8x24xf32, #tpu.memory_space<vmem>>, %arg3: memref<2x8xf32, #tpu.memory_space<vmem>>, %arg4: memref<2x2x32xf32, #tpu.memory_space<vmem>>, %arg5: memref<2x2x32xf32, #tpu.memory_space<vmem>>, %arg6: memref<2x8x32xf32, #tpu.memory_space<vmem>>, %arg7: memref<72x128xf32, #tpu.memory_space<vmem>>, %arg8: memref<1x128xf32, #tpu.memory_space<vmem>>, %arg9: memref<64x128xf32, #tpu.memory_space<vmem>>, %arg10: memref<1x128xf32, #tpu.memory_space<vmem>>, %arg11: memref<2x5x128xf32, #tpu.memory_space<vmem>>, %arg12: memref<2x2x32xf32, #tpu.memory_space<vmem>>, %arg13: memref<2x2x32xf32, #tpu.memory_space<vmem>>) attributes {dimension_semantics = [#tpu.dimension_semantics<arbitrary>], iteration_bounds = array<i64: 1>, scalar_prefetch = 0 : i64, scratch_operands = 2 : i64, tpu.core_type = #tpu.core_type<tc>, window_params = [{pipeline_mode = #tpu.pipeline_mode<synchronous>, transform_indices = @transform_0, window_bounds = array<i64: 2, 5, 16>}, {pipeline_mode = #tpu.pipeline_mode<synchronous>, transform_indices = @transform_1, window_bounds = array<i64: 2, 8, 24>}, {pipeline_mode = #tpu.pipeline_mode<synchronous>, transform_indices = @transform_2, window_bounds = array<i64: 2, 8>}, {pipeline_mode = #tpu.pipeline_mode<synchronous>, transform_indices = @transform_3, window_bounds = array<i64: 2, 2, 32>}, {pipeline_mode = #tpu.pipeline_mode<synchronous>, transform_indices = @transform_4, window_bounds = array<i64: 2, 2, 32>}, {pipeline_mode = #tpu.pipeline_mode<synchronous>, transform_indices = @transform_5, window_bounds = array<i64: 2, 8, 32>}, {pipeline_mode = #tpu.pipeline_mode<synchronous>, transform_indices = @transform_6, window_bounds = array<i64: 72, 128>}, {pipeline_mode = #tpu.pipeline_mode<synchronous>, transform_indices = @transform_7, window_bounds = array<i64: 1, 128>}, {pipeline_mode = #tpu.pipeline_mode<synchronous>, transform_indices = @transform_8, window_bounds = array<i64: 64, 128>}, {pipeline_mode = #tpu.pipeline_mode<synchronous>, transform_indices = @transform_9, window_bounds = array<i64: 1, 128>}, {pipeline_mode = #tpu.pipeline_mode<synchronous>, transform_indices = @transform_10, window_bounds = array<i64: 2, 5, 128>}]} {
    %c0 = arith.constant 0 : index
    %c0_0 = arith.constant 0 : index
    %c0_1 = arith.constant 0 : index
    %0 = vector.load %arg4[%c0, %c0_0, %c0_1] : memref<2x2x32xf32, #tpu.memory_space<vmem>>, vector<2x2x32xf32>
    %c0_2 = arith.constant 0 : index
    %c0_3 = arith.constant 0 : index
    %c0_4 = arith.constant 0 : index
    %1 = vector.load %arg12[%c0_2, %c0_3, %c0_4] : memref<2x2x32xf32, #tpu.memory_space<vmem>>, vector<2x2x32xf32>
    tpu.vector_store %arg12[%c0_2, %c0_3, %c0_4], %0 {strides = array<i32>} : memref<2x2x32xf32, #tpu.memory_space<vmem>>, vector<2x2x32xf32>,
    %c0_5 = arith.constant 0 : index
    %c0_6 = arith.constant 0 : index
    %c0_7 = arith.constant 0 : index
    %2 = vector.load %arg5[%c0_5, %c0_6, %c0_7] : memref<2x2x32xf32, #tpu.memory_space<vmem>>, vector<2x2x32xf32>
    %c0_8 = arith.constant 0 : index
    %c0_9 = arith.constant 0 : index
    %c0_10 = arith.constant 0 : index
    %3 = vector.load %arg13[%c0_8, %c0_9, %c0_10] : memref<2x2x32xf32, #tpu.memory_space<vmem>>, vector<2x2x32xf32>
    tpu.vector_store %arg13[%c0_8, %c0_9, %c0_10], %2 {strides = array<i32>} : memref<2x2x32xf32, #tpu.memory_space<vmem>>, vector<2x2x32xf32>,
    %c0_11 = arith.constant 0 : index
    %c0_12 = arith.constant 0 : index
    %c0_13 = arith.constant 0 : index
    %4 = vector.load %arg2[%c0_11, %c0_12, %c0_13] : memref<2x8x24xf32, #tpu.memory_space<vmem>>, vector<2x8x24xf32>
    %c0_14 = arith.constant 0 : index
    %c0_15 = arith.constant 0 : index
    %c0_16 = arith.constant 0 : index
    %5 = vector.load %arg6[%c0_14, %c0_15, %c0_16] : memref<2x8x32xf32, #tpu.memory_space<vmem>>, vector<2x8x32xf32>
    %c0_17 = arith.constant 0 : index
    %c0_18 = arith.constant 0 : index
    %6 = vector.load %arg7[%c0_17, %c0_18] : memref<72x128xf32, #tpu.memory_space<vmem>>, vector<72x128xf32>
    %c0_19 = arith.constant 0 : index
    %c0_20 = arith.constant 0 : index
    %7 = vector.load %arg9[%c0_19, %c0_20] : memref<64x128xf32, #tpu.memory_space<vmem>>, vector<64x128xf32>
    %c0_21 = arith.constant 0 : index
    %c0_22 = arith.constant 0 : index
    %8 = vector.load %arg8[%c0_21, %c0_22] : memref<1x128xf32, #tpu.memory_space<vmem>>, vector<1x128xf32>
    %9 = vector.shape_cast %8 : vector<1x128xf32> to vector<1x128xf32>
    %10 = vector.broadcast %9 : vector<1x128xf32> to vector<2x128xf32>
    %c0_23 = arith.constant 0 : index
    %c0_24 = arith.constant 0 : index
    %11 = vector.load %arg10[%c0_23, %c0_24] : memref<1x128xf32, #tpu.memory_space<vmem>>, vector<1x128xf32>
    %12 = vector.shape_cast %11 : vector<1x128xf32> to vector<1x128xf32>
    %13 = vector.broadcast %12 : vector<1x128xf32> to vector<2x128xf32>
    %c0_25 = arith.constant 0 : index
    %c0_26 = arith.constant 0 : index
    %14 = vector.load %arg3[%c0_25, %c0_26] : memref<2x8xf32, #tpu.memory_space<vmem>>, vector<2x8xf32>
    %cst = arith.constant 0.000000e+00 : f32
    %15 = vector.broadcast %cst : f32 to vector<2x8xf32>
    %16 = arith.cmpf ogt, %14, %15 : vector<2x8xf32>
    %cst_27 = arith.constant 0.000000e+00 : f32
    %cst_28 = arith.constant -1.000000e+30 : f32
    %17 = vector.broadcast %cst_27 : f32 to vector<2x8xf32>
    %18 = vector.broadcast %cst_28 : f32 to vector<2x8xf32>
    %19 = arith.select %16, %17, %18 : vector<2x8xi1>, vector<2x8xf32>
    %cst_29 = arith.constant 0.000000e+00 : f32
    %20 = vector.broadcast %cst_29 : f32 to vector<2x48xf32>
    %c0_i32 = arith.constant 0 : i32
    %c5_i32 = arith.constant 5 : i32
    %21 = arith.addi %c0_i32, %c5_i32 : i32
    %c1_i32 = arith.constant 1 : i32
    scf.for %arg14 = %c0_i32 to %21 step %c1_i32  : i32 {
      %c1_i32_31 = arith.constant 1 : i32
      %22 = arith.muli %arg14, %c1_i32_31 : i32
      %c0_i32_32 = arith.constant 0 : i32
      %23 = arith.addi %c0_i32_32, %22 : i32
      %c0_33 = arith.constant 0 : index
      %c0_34 = arith.constant 0 : index
      %c0_35 = arith.constant 0 : index
      %24 = vector.load %arg12[%c0_33, %c0_34, %c0_35] : memref<2x2x32xf32, #tpu.memory_space<vmem>>, vector<1x2x32xf32>
      %25 = vector.shape_cast %24 : vector<1x2x32xf32> to vector<2x32xf32>
      %c1 = arith.constant 1 : index
      %c0_36 = arith.constant 0 : index
      %c0_37 = arith.constant 0 : index
      %26 = vector.load %arg12[%c1, %c0_36, %c0_37] : memref<2x2x32xf32, #tpu.memory_space<vmem>>, vector<1x2x32xf32>
      %27 = vector.shape_cast %26 : vector<1x2x32xf32> to vector<2x32xf32>
      %28 = vector.shape_cast %27 : vector<2x32xf32> to vector<2x1x32xf32>
      %29 = vector.broadcast %28 : vector<2x1x32xf32> to vector<2x8x32xf32>
      %30 = arith.mulf %29, %5 : vector<2x8x32xf32>
      %cst_38 = arith.constant dense<0.000000e+00> : vector<2x8xf32>
      %31 = vector.multi_reduction <add>, %30, %cst_38 [2] : vector<2x8x32xf32> to vector<2x8xf32>
      %32 = arith.addf %31, %19 : vector<2x8xf32>
      %cst_39 = arith.constant dense<0xFF800000> : vector<2xf32>
      %33 = vector.multi_reduction <maximumf>, %32, %cst_39 [1] : vector<2x8xf32> to vector<2xf32>
      %34 = vector.shape_cast %33 : vector<2xf32> to vector<2x1xf32>
      %35 = vector.broadcast %34 : vector<2x1xf32> to vector<2x8xf32>
      %36 = arith.subf %32, %35 : vector<2x8xf32>
      %37 = math.exp %36 : vector<2x8xf32>
      %cst_40 = arith.constant dense<0.000000e+00> : vector<2xf32>
      %38 = vector.multi_reduction <add>, %37, %cst_40 [1] : vector<2x8xf32> to vector<2xf32>
      %39 = vector.shape_cast %38 : vector<2xf32> to vector<2x1xf32>
      %40 = tpu.reciprocal %39 {approx = true} : vector<2x1xf32> -> vector<2x1xf32>
      %41 = vector.broadcast %40 : vector<2x1xf32> to vector<2x8xf32>
      %42 = arith.mulf %37, %41 : vector<2x8xf32>
      %43 = vector.shape_cast %42 : vector<2x8xf32> to vector<2x8x1xf32>
      %44 = vector.broadcast %43 : vector<2x8x1xf32> to vector<2x8x24xf32>
      %45 = arith.mulf %44, %4 : vector<2x8x24xf32>
      %cst_41 = arith.constant dense<0.000000e+00> : vector<2x24xf32>
      %46 = vector.multi_reduction <add>, %45, %cst_41 [1] : vector<2x8x24xf32> to vector<2x24xf32>
      %c0_42 = arith.constant 0 : index
      %47 = arith.index_cast %23 : i32 to index
      %c0_43 = arith.constant 0 : index
      %48 = vector.load %arg1[%c0_42, %47, %c0_43] : memref<2x5x16xf32, #tpu.memory_space<vmem>>, vector<2x1x16xf32>
      %49 = vector.shape_cast %48 : vector<2x1x16xf32> to vector<2x16xf32>
      %50 = tpu.concatenate %49, %46, %25 in 1 : vector<2x16xf32>, vector<2x24xf32>, vector<2x32xf32> -> vector<2x72xf32>
      %cst_44 = arith.constant dense<0.000000e+00> : vector<2x128xf32>
      %51 = tpu.matmul %50, %6, %cst_44 {dimension_numbers = #tpu.dot_dimension_numbers<[1], [0], [0], [1], [0, 0, 1, 1], [], []>} : vector<2x72xf32>, vector<72x128xf32>, vector<2x128xf32> -> vector<2x128xf32>
      %52 = arith.addf %51, %10 : vector<2x128xf32>
      %53 = arith.negf %52 : vector<2x128xf32>
      %54 = math.exp %53 : vector<2x128xf32>
      %cst_45 = arith.constant 1.000000e+00 : f32
      %55 = vector.broadcast %cst_45 : f32 to vector<2x128xf32>
      %56 = arith.addf %55, %54 : vector<2x128xf32>
      %57 = arith.divf %55, %56 : vector<2x128xf32>
      %58 = math.tanh %52 : vector<2x128xf32>
      %59 = vector.extract_strided_slice %57 {offsets = [0, 32], sizes = [2, 32], strides = [1, 1]} : vector<2x128xf32> to vector<2x32xf32>
      %c0_46 = arith.constant 0 : index
      %c0_47 = arith.constant 0 : index
      %c0_48 = arith.constant 0 : index
      %60 = vector.load %arg13[%c0_46, %c0_47, %c0_48] : memref<2x2x32xf32, #tpu.memory_space<vmem>>, vector<1x2x32xf32>
      %61 = vector.shape_cast %60 : vector<1x2x32xf32> to vector<2x32xf32>
      %62 = arith.mulf %59, %61 : vector<2x32xf32>
      %63 = vector.extract_strided_slice %57 {offsets = [0, 0], sizes = [2, 32], strides = [1, 1]} : vector<2x128xf32> to vector<2x32xf32>
      %64 = vector.extract_strided_slice %58 {offsets = [0, 64], sizes = [2, 32], strides = [1, 1]} : vector<2x128xf32> to vector<2x32xf32>
      %65 = arith.mulf %63, %64 : vector<2x32xf32>
      %66 = arith.addf %62, %65 : vector<2x32xf32>
      %67 = vector.extract_strided_slice %57 {offsets = [0, 96], sizes = [2, 32], strides = [1, 1]} : vector<2x128xf32> to vector<2x32xf32>
      %68 = math.tanh %66 : vector<2x32xf32>
      %69 = arith.mulf %67, %68 : vector<2x32xf32>
      %70 = tpu.concatenate %69, %27 in 1 : vector<2x32xf32>, vector<2x32xf32> -> vector<2x64xf32>
      %cst_49 = arith.constant dense<0.000000e+00> : vector<2x128xf32>
      %71 = tpu.matmul %70, %7, %cst_49 {dimension_numbers = #tpu.dot_dimension_numbers<[1], [0], [0], [1], [0, 0, 1, 1], [], []>} : vector<2x64xf32>, vector<64x128xf32>, vector<2x128xf32> -> vector<2x128xf32>
      %72 = arith.addf %71, %13 : vector<2x128xf32>
      %73 = arith.negf %72 : vector<2x128xf32>
      %74 = math.exp %73 : vector<2x128xf32>
      %cst_50 = arith.constant 1.000000e+00 : f32
      %75 = vector.broadcast %cst_50 : f32 to vector<2x128xf32>
      %76 = arith.addf %75, %74 : vector<2x128xf32>
      %77 = arith.divf %75, %76 : vector<2x128xf32>
      %78 = math.tanh %72 : vector<2x128xf32>
      %79 = vector.extract_strided_slice %77 {offsets = [0, 32], sizes = [2, 32], strides = [1, 1]} : vector<2x128xf32> to vector<2x32xf32>
      %c1_51 = arith.constant 1 : index
      %c0_52 = arith.constant 0 : index
      %c0_53 = arith.constant 0 : index
      %80 = vector.load %arg13[%c1_51, %c0_52, %c0_53] : memref<2x2x32xf32, #tpu.memory_space<vmem>>, vector<1x2x32xf32>
      %81 = vector.shape_cast %80 : vector<1x2x32xf32> to vector<2x32xf32>
      %82 = arith.mulf %79, %81 : vector<2x32xf32>
      %83 = vector.extract_strided_slice %77 {offsets = [0, 0], sizes = [2, 32], strides = [1, 1]} : vector<2x128xf32> to vector<2x32xf32>
      %84 = vector.extract_strided_slice %78 {offsets = [0, 64], sizes = [2, 32], strides = [1, 1]} : vector<2x128xf32> to vector<2x32xf32>
      %85 = arith.mulf %83, %84 : vector<2x32xf32>
      %86 = arith.addf %82, %85 : vector<2x32xf32>
      %87 = vector.extract_strided_slice %77 {offsets = [0, 96], sizes = [2, 32], strides = [1, 1]} : vector<2x128xf32> to vector<2x32xf32>
      %88 = math.tanh %86 : vector<2x32xf32>
      %89 = arith.mulf %87, %88 : vector<2x32xf32>
      %c0_54 = arith.constant 0 : index
      %c0_55 = arith.constant 0 : index
      %c0_56 = arith.constant 0 : index
      %90 = vector.load %arg12[%c0_54, %c0_55, %c0_56] : memref<2x2x32xf32, #tpu.memory_space<vmem>>, vector<1x2x32xf32>
      %91 = vector.shape_cast %90 : vector<1x2x32xf32> to vector<2x32xf32>
      %92 = vector.shape_cast %69 : vector<2x32xf32> to vector<1x2x32xf32>
      tpu.vector_store %arg12[%c0_54, %c0_55, %c0_56], %92 {strides = array<i32>} : memref<2x2x32xf32, #tpu.memory_space<vmem>>, vector<1x2x32xf32>,
      %c0_57 = arith.constant 0 : index
      %c0_58 = arith.constant 0 : index
      %c0_59 = arith.constant 0 : index
      %93 = vector.load %arg13[%c0_57, %c0_58, %c0_59] : memref<2x2x32xf32, #tpu.memory_space<vmem>>, vector<1x2x32xf32>
      %94 = vector.shape_cast %93 : vector<1x2x32xf32> to vector<2x32xf32>
      %95 = vector.shape_cast %66 : vector<2x32xf32> to vector<1x2x32xf32>
      tpu.vector_store %arg13[%c0_57, %c0_58, %c0_59], %95 {strides = array<i32>} : memref<2x2x32xf32, #tpu.memory_space<vmem>>, vector<1x2x32xf32>,
      %c1_60 = arith.constant 1 : index
      %c0_61 = arith.constant 0 : index
      %c0_62 = arith.constant 0 : index
      %96 = vector.load %arg12[%c1_60, %c0_61, %c0_62] : memref<2x2x32xf32, #tpu.memory_space<vmem>>, vector<1x2x32xf32>
      %97 = vector.shape_cast %96 : vector<1x2x32xf32> to vector<2x32xf32>
      %98 = vector.shape_cast %89 : vector<2x32xf32> to vector<1x2x32xf32>
      tpu.vector_store %arg12[%c1_60, %c0_61, %c0_62], %98 {strides = array<i32>} : memref<2x2x32xf32, #tpu.memory_space<vmem>>, vector<1x2x32xf32>,
      %c1_63 = arith.constant 1 : index
      %c0_64 = arith.constant 0 : index
      %c0_65 = arith.constant 0 : index
      %99 = vector.load %arg13[%c1_63, %c0_64, %c0_65] : memref<2x2x32xf32, #tpu.memory_space<vmem>>, vector<1x2x32xf32>
      %100 = vector.shape_cast %99 : vector<1x2x32xf32> to vector<2x32xf32>
      %101 = vector.shape_cast %86 : vector<2x32xf32> to vector<1x2x32xf32>
      tpu.vector_store %arg13[%c1_63, %c0_64, %c0_65], %101 {strides = array<i32>} : memref<2x2x32xf32, #tpu.memory_space<vmem>>, vector<1x2x32xf32>,
      %102 = tpu.concatenate %89, %46, %49, %42, %20 in 1 : vector<2x32xf32>, vector<2x24xf32>, vector<2x16xf32>, vector<2x8xf32>, vector<2x48xf32> -> vector<2x128xf32>
      %103 = vector.shape_cast %102 : vector<2x128xf32> to vector<2x1x128xf32>
      %c0_66 = arith.constant 0 : index
      %104 = arith.index_cast %23 : i32 to index
      %c0_67 = arith.constant 0 : index
      %105 = vector.load %arg11[%c0_66, %104, %c0_67] : memref<2x5x128xf32, #tpu.memory_space<vmem>>, vector<2x1x128xf32>
      tpu.vector_store %arg11[%c0_66, %104, %c0_67], %103 {strides = array<i32>} : memref<2x5x128xf32, #tpu.memory_space<vmem>>, vector<2x1x128xf32>,
    }
    %c5_i32_30 = arith.constant 5 : i32
    return
  }
  func.func @transform_0(%arg0: i32) -> (i32, i32, i32) {
    %c0_i32 = arith.constant 0 : i32
    %c0_i32_0 = arith.constant 0 : i32
    %c0_i32_1 = arith.constant 0 : i32
    %c0_i32_2 = arith.constant 0 : i32
    return %c0_i32, %c0_i32_0, %c0_i32_1 : i32, i32, i32
  }
  func.func @transform_1(%arg0: i32) -> (i32, i32, i32) {
    %c0_i32 = arith.constant 0 : i32
    %c0_i32_0 = arith.constant 0 : i32
    %c0_i32_1 = arith.constant 0 : i32
    %c0_i32_2 = arith.constant 0 : i32
    return %c0_i32, %c0_i32_0, %c0_i32_1 : i32, i32, i32
  }
  func.func @transform_2(%arg0: i32) -> (i32, i32) {
    %c0_i32 = arith.constant 0 : i32
    %c0_i32_0 = arith.constant 0 : i32
    %c0_i32_1 = arith.constant 0 : i32
    return %c0_i32, %c0_i32_0 : i32, i32
  }
  func.func @transform_3(%arg0: i32) -> (i32, i32, i32) {
    %c0_i32 = arith.constant 0 : i32
    %c0_i32_0 = arith.constant 0 : i32
    %c0_i32_1 = arith.constant 0 : i32
    %c0_i32_2 = arith.constant 0 : i32
    return %c0_i32, %c0_i32_0, %c0_i32_1 : i32, i32, i32
  }
  func.func @transform_4(%arg0: i32) -> (i32, i32, i32) {
    %c0_i32 = arith.constant 0 : i32
    %c0_i32_0 = arith.constant 0 : i32
    %c0_i32_1 = arith.constant 0 : i32
    %c0_i32_2 = arith.constant 0 : i32
    return %c0_i32, %c0_i32_0, %c0_i32_1 : i32, i32, i32
  }
  func.func @transform_5(%arg0: i32) -> (i32, i32, i32) {
    %c0_i32 = arith.constant 0 : i32
    %c0_i32_0 = arith.constant 0 : i32
    %c0_i32_1 = arith.constant 0 : i32
    %c0_i32_2 = arith.constant 0 : i32
    return %c0_i32, %c0_i32_0, %c0_i32_1 : i32, i32, i32
  }
  func.func @transform_6(%arg0: i32) -> (i32, i32) {
    %c0_i32 = arith.constant 0 : i32
    %c0_i32_0 = arith.constant 0 : i32
    %c0_i32_1 = arith.constant 0 : i32
    return %c0_i32, %c0_i32_0 : i32, i32
  }
  func.func @transform_7(%arg0: i32) -> (i32, i32) {
    %c0_i32 = arith.constant 0 : i32
    %c0_i32_0 = arith.constant 0 : i32
    %c0_i32_1 = arith.constant 0 : i32
    return %c0_i32, %c0_i32_0 : i32, i32
  }
  func.func @transform_8(%arg0: i32) -> (i32, i32) {
    %c0_i32 = arith.constant 0 : i32
    %c0_i32_0 = arith.constant 0 : i32
    %c0_i32_1 = arith.constant 0 : i32
    return %c0_i32, %c0_i32_0 : i32, i32
  }
  func.func @transform_9(%arg0: i32) -> (i32, i32) {
    %c0_i32 = arith.constant 0 : i32
    %c0_i32_0 = arith.constant 0 : i32
    %c0_i32_1 = arith.constant 0 : i32
    return %c0_i32, %c0_i32_0 : i32, i32
  }
  func.func @transform_10(%arg0: i32) -> (i32, i32, i32) {
    %c0_i32 = arith.constant 0 : i32
    %c0_i32_0 = arith.constant 0 : i32
    %c0_i32_1 = arith.constant 0 : i32
    %c0_i32_2 = arith.constant 0 : i32
    return %c0_i32, %c0_i32_0, %c0_i32_1 : i32, i32, i32
  }
}

module attributes {stable_mosaic.version = 11 : i64} {
  func.func @_projection_kernel(%arg0: i32, %arg1: memref<10x128xf32, #tpu.memory_space<vmem>>, %arg2: memref<128x224xf32, #tpu.memory_space<vmem>>, %arg3: memref<1x224xf32, #tpu.memory_space<vmem>>, %arg4: memref<224x40xf32, #tpu.memory_space<vmem>>, %arg5: memref<1x40xf32, #tpu.memory_space<vmem>>, %arg6: memref<10x40xf32, #tpu.memory_space<vmem>>) attributes {dimension_semantics = [#tpu.dimension_semantics<arbitrary>], iteration_bounds = array<i64: 1>, scalar_prefetch = 0 : i64, scratch_operands = 0 : i64, tpu.core_type = #tpu.core_type<tc>, window_params = [{pipeline_mode = #tpu.pipeline_mode<synchronous>, transform_indices = @transform_0, window_bounds = array<i64: 10, 128>}, {pipeline_mode = #tpu.pipeline_mode<synchronous>, transform_indices = @transform_1, window_bounds = array<i64: 128, 224>}, {pipeline_mode = #tpu.pipeline_mode<synchronous>, transform_indices = @transform_2, window_bounds = array<i64: 1, 224>}, {pipeline_mode = #tpu.pipeline_mode<synchronous>, transform_indices = @transform_3, window_bounds = array<i64: 224, 40>}, {pipeline_mode = #tpu.pipeline_mode<synchronous>, transform_indices = @transform_4, window_bounds = array<i64: 1, 40>}, {pipeline_mode = #tpu.pipeline_mode<synchronous>, transform_indices = @transform_5, window_bounds = array<i64: 10, 40>}]} {
    %c0 = arith.constant 0 : index
    %c0_0 = arith.constant 0 : index
    %0 = vector.load %arg1[%c0, %c0_0] : memref<10x128xf32, #tpu.memory_space<vmem>>, vector<10x128xf32>
    %c0_1 = arith.constant 0 : index
    %c0_2 = arith.constant 0 : index
    %1 = vector.load %arg2[%c0_1, %c0_2] : memref<128x224xf32, #tpu.memory_space<vmem>>, vector<128x224xf32>
    %cst = arith.constant dense<0.000000e+00> : vector<10x224xf32>
    %2 = tpu.matmul %0, %1, %cst {dimension_numbers = #tpu.dot_dimension_numbers<[1], [0], [0], [1], [0, 0, 1, 1], [], []>} : vector<10x128xf32>, vector<128x224xf32>, vector<10x224xf32> -> vector<10x224xf32>
    %c0_3 = arith.constant 0 : index
    %c0_4 = arith.constant 0 : index
    %3 = vector.load %arg3[%c0_3, %c0_4] : memref<1x224xf32, #tpu.memory_space<vmem>>, vector<1x224xf32>
    %4 = vector.broadcast %3 : vector<1x224xf32> to vector<10x224xf32>
    %5 = arith.addf %2, %4 : vector<10x224xf32>
    %6 = math.tanh %5 : vector<10x224xf32>
    %c0_5 = arith.constant 0 : index
    %c0_6 = arith.constant 0 : index
    %7 = vector.load %arg4[%c0_5, %c0_6] : memref<224x40xf32, #tpu.memory_space<vmem>>, vector<224x40xf32>
    %cst_7 = arith.constant dense<0.000000e+00> : vector<10x40xf32>
    %8 = tpu.matmul %6, %7, %cst_7 {dimension_numbers = #tpu.dot_dimension_numbers<[1], [0], [0], [1], [0, 0, 1, 1], [], []>} : vector<10x224xf32>, vector<224x40xf32>, vector<10x40xf32> -> vector<10x40xf32>
    %c0_8 = arith.constant 0 : index
    %c0_9 = arith.constant 0 : index
    %9 = vector.load %arg5[%c0_8, %c0_9] : memref<1x40xf32, #tpu.memory_space<vmem>>, vector<1x40xf32>
    %10 = vector.broadcast %9 : vector<1x40xf32> to vector<10x40xf32>
    %11 = arith.addf %8, %10 : vector<10x40xf32>
    %c0_10 = arith.constant 0 : index
    %c0_11 = arith.constant 0 : index
    %12 = vector.load %arg6[%c0_10, %c0_11] : memref<10x40xf32, #tpu.memory_space<vmem>>, vector<10x40xf32>
    tpu.vector_store %arg6[%c0_10, %c0_11], %11 {strides = array<i32>} : memref<10x40xf32, #tpu.memory_space<vmem>>, vector<10x40xf32>,
    return
  }
  func.func @transform_0(%arg0: i32) -> (i32, i32) {
    %c0_i32 = arith.constant 0 : i32
    %c0_i32_0 = arith.constant 0 : i32
    %c0_i32_1 = arith.constant 0 : i32
    return %c0_i32, %c0_i32_0 : i32, i32
  }
  func.func @transform_1(%arg0: i32) -> (i32, i32) {
    %c0_i32 = arith.constant 0 : i32
    %c0_i32_0 = arith.constant 0 : i32
    %c0_i32_1 = arith.constant 0 : i32
    return %c0_i32, %c0_i32_0 : i32, i32
  }
  func.func @transform_2(%arg0: i32) -> (i32, i32) {
    %c0_i32 = arith.constant 0 : i32
    %c0_i32_0 = arith.constant 0 : i32
    %c0_i32_1 = arith.constant 0 : i32
    return %c0_i32, %c0_i32_0 : i32, i32
  }
  func.func @transform_3(%arg0: i32) -> (i32, i32) {
    %c0_i32 = arith.constant 0 : i32
    %c0_i32_0 = arith.constant 0 : i32
    %c0_i32_1 = arith.constant 0 : i32
    return %c0_i32, %c0_i32_0 : i32, i32
  }
  func.func @transform_4(%arg0: i32) -> (i32, i32) {
    %c0_i32 = arith.constant 0 : i32
    %c0_i32_0 = arith.constant 0 : i32
    %c0_i32_1 = arith.constant 0 : i32
    return %c0_i32, %c0_i32_0 : i32, i32
  }
  func.func @transform_5(%arg0: i32) -> (i32, i32) {
    %c0_i32 = arith.constant 0 : i32
    %c0_i32_0 = arith.constant 0 : i32
    %c0_i32_1 = arith.constant 0 : i32
    return %c0_i32, %c0_i32_0 : i32, i32
  }
}

</mosaic_0001>

<llo_original>
// kernel: decoder_forward.3
$region0: #{decoder_forward.3}
  #allocation0 [shape = 'u32[]', space=smem, size = 0x4, offset = 0x4, fixed_abs, tag = 'smem constant byte address 0x4 - core index']
  #allocation1 [shape = 'u32[144,128]{1,0:T(1,128)}', space=vmem, size = 0x12000, scoped, tag = 'internal scratch']
  %s0 = inlined_call_operand.vmem [shape: f32[10,128], index: 0, kind: input, shape index: {}]
  %s1 = inlined_call_operand.vmem [shape: f32[128,224], index: 1, kind: input, shape index: {}]
  %s2 = inlined_call_operand.vmem [shape: f32[1,224], index: 2, kind: input, shape index: {}]
  %s3 = inlined_call_operand.vmem [shape: f32[224,40], index: 3, kind: input, shape index: {}]
  %s4 = inlined_call_operand.vmem [shape: f32[1,40], index: 4, kind: input, shape index: {}]
  %s5 = inlined_call_operand.vmem [shape: f32[10,40], index: 5, kind: output, shape index: {}]
  %s6 = sld [smem:[#allocation0]]
  $region30: #{decoder_forward.3} parent=0
    _
  %s8 = ssub.s32 1, %s6
  %s9 = scalar_select 0, %s8, %s6
  // Predicated region
  $region2: #{decoder_forward.3} parent=0 // pred_check
    _
  $region3: #{decoder_forward.3} parent=0 // pred_check_branch
    %11 = sbr.rel (0) target = $region5
  $region4: #{decoder_forward.3} parent=0 // pred_region
    _
  $region5: #{decoder_forward.3} parent=0 // pred_fallthru
    _
  // Predicated region
  $region6: #{decoder_forward.3} parent=0 // pred_check
    _
  $region7: #{decoder_forward.3} parent=0 // pred_check_branch
    %13 = sbr.rel (0) target = $region9
  $region8: #{decoder_forward.3} parent=0 // pred_region
    _
  $region9: #{decoder_forward.3} parent=0 // pred_fallthru
    _
  // Predicated region
  $region10: #{decoder_forward.3} parent=0 // pred_check
    _
  $region11: #{decoder_forward.3} parent=0 // pred_check_branch
    %15 = sbr.rel (0) target = $region13
  $region12: #{decoder_forward.3} parent=0 // pred_region
    _
  $region13: #{decoder_forward.3} parent=0 // pred_fallthru
    _
  // Predicated region
  $region14: #{decoder_forward.3} parent=0 // pred_check
    _
  $region15: #{decoder_forward.3} parent=0 // pred_check_branch
    %17 = sbr.rel (0) target = $region17
  $region16: #{decoder_forward.3} parent=0 // pred_region
    _
  $region17: #{decoder_forward.3} parent=0 // pred_fallthru
    _
  // Predicated region
  $region18: #{decoder_forward.3} parent=0 // pred_check
    _
  $region19: #{decoder_forward.3} parent=0 // pred_check_branch
    %19 = sbr.rel (0) target = $region21
  $region20: #{decoder_forward.3} parent=0 // pred_region
    _
  $region21: #{decoder_forward.3} parent=0 // pred_fallthru
    _
  %v20 = vld [vmem:[%s0] sm:$0xff]
  %v21 = vld [vmem:[%s0 + $0x8] sm:$0x3]
  %v22 = vld [vmem:[%s1] sm:$0xff]
  %v23 = vld [vmem:[%s1 + $0x8] sm:$0xff]
  %v24 = vld [vmem:[%s1 + $0x10] sm:$0xff]
  %v25 = vld [vmem:[%s1 + $0x18] sm:$0xff]
  %v26 = vld [vmem:[%s1 + $0x20] sm:$0xff]
  %v27 = vld [vmem:[%s1 + $0x28] sm:$0xff]
  %v28 = vld [vmem:[%s1 + $0x30] sm:$0xff]
  %v29 = vld [vmem:[%s1 + $0x38] sm:$0xff]
  %v30 = vld [vmem:[%s1 + $0x40] sm:$0xff]
  %v31 = vld [vmem:[%s1 + $0x48] sm:$0xff]
  %v32 = vld [vmem:[%s1 + $0x50] sm:$0xff]
  %v33 = vld [vmem:[%s1 + $0x58] sm:$0xff]
  %v34 = vld [vmem:[%s1 + $0x60] sm:$0xff]
  %v35 = vld [vmem:[%s1 + $0x68] sm:$0xff]
  %v36 = vld [vmem:[%s1 + $0x70] sm:$0xff]
  %v37 = vld [vmem:[%s1 + $0x78] sm:$0xff]
  %v38 = vld [vmem:[%s1 + $0x80] sm:$0xff]
  %v39 = vld [vmem:[%s1 + $0x88] sm:$0xff]
  %v40 = vld [vmem:[%s1 + $0x90] sm:$0xff]
  %v41 = vld [vmem:[%s1 + $0x98] sm:$0xff]
  %v42 = vld [vmem:[%s1 + $0xa0] sm:$0xff]
  %v43 = vld [vmem:[%s1 + $0xa8] sm:$0xff]
  %v44 = vld [vmem:[%s1 + $0xb0] sm:$0xff]
  %v45 = vld [vmem:[%s1 + $0xb8] sm:$0xff]
  %v46 = vld [vmem:[%s1 + $0xc0] sm:$0xff]
  %v47 = vld [vmem:[%s1 + $0xc8] sm:$0xff]
  %v48 = vld [vmem:[%s1 + $0xd0] sm:$0xff]
  %v49 = vld [vmem:[%s1 + $0xd8] sm:$0xff]
  %v50 = vld [vmem:[%s1 + $0xe0] sm:$0xff]
  %v51 = vld [vmem:[%s1 + $0xe8] sm:$0xff]
  %v52 = vld [vmem:[%s1 + $0xf0] sm:$0xff]
  %v53 = vld [vmem:[%s1 + $0xf8] sm:$0xff]
  %v54 = vld [vmem:[%s2] sm:$0x3]
  %v56 = vlaneseq
  %v57 = vshrl.u32 %v56, 7
  %v58 = vsub.s32 0, %v57
  %v59 = vrot.slane %v54, %v58
  %v60 = vlaneseq
  %v61 = vshrl.u32 %v60, 7
  %v62 = vsub.s32 1, %v61
  %v63 = vrot.slane %v54, %v62
  %66 = vmatprep.subr.mxu0 %v23
  %67 = vmatpush1.msra.mxu0 %v22
  %68 = vmatprep.subr.mxu0 %v25
  %69 = vmatpush1.msra.mxu0 %v24
  %70 = vmatprep.subr.mxu0 %v27
  %71 = vmatpush1.msra.mxu0 %v26
  %72 = vmatprep.subr.mxu0 %v29
  %73 = vmatpush1.msra.mxu0 %v28
  %74 = vmatprep.subr.mxu0 %v31
  %75 = vmatpush1.msra.mxu0 %v30
  %76 = vmatprep.subr.mxu0 %v33
  %77 = vmatpush1.msra.mxu0 %v32
  %78 = vmatprep.subr.mxu0 %v35
  %79 = vmatpush1.msra.mxu0 %v34
  %80 = vmatprep.subr.mxu0 %v37
  %81 = vmatpush1.msra.mxu0 %v36
  %82 = vmatprep.subr.mxu0 %v39
  %83 = vmatpush1.msra.mxu0 %v38
  %84 = vmatprep.subr.mxu0 %v41
  %85 = vmatpush1.msra.mxu0 %v40
  %86 = vmatprep.subr.mxu0 %v43
  %87 = vmatpush1.msra.mxu0 %v42
  %88 = vmatprep.subr.mxu0 %v45
  %89 = vmatpush1.msra.mxu0 %v44
  %90 = vmatprep.subr.mxu0 %v47
  %91 = vmatpush1.msra.mxu0 %v46
  %92 = vmatprep.subr.mxu0 %v49
  %93 = vmatpush1.msra.mxu0 %v48
  %94 = vmatprep.subr.mxu0 %v51
  %95 = vmatpush1.msra.mxu0 %v50
  %96 = vmatprep.subr.mxu0 %v53
  %97 = vmatpush1.msra.mxu0 %v52
  %98 = vmatprep.subr.mxu0 0.0
  %99 = vmatpush1.msra.mxu0 0.0
  %100 = vmatprep.subr.mxu0 0.0
  %101 = vmatpush1.msra.mxu0 0.0
  %102 = vmatprep.subr.mxu0 0.0
  %103 = vmatpush1.msra.mxu0 0.0
  %104 = vmatprep.subr.mxu0 0.0
  %105 = vmatpush1.msra.mxu0 0.0
  %106 = vmatprep.subr.mxu0 0.0
  %107 = vmatpush1.msra.mxu0 0.0
  %108 = vmatprep.subr.mxu0 0.0
  %109 = vmatpush1.msra.mxu0 0.0
  %110 = vmatprep.subr.mxu0 0.0
  %111 = vmatpush1.msra.mxu0 0.0
  %112 = vmatprep.subr.mxu0 0.0
  %113 = vmatpush1.msra.mxu0 0.0
  %114 = vmatprep.subr.mxu0 0.0
  %115 = vmatpush1.msra.mxu0 0.0
  %116 = vmatprep.subr.mxu0 0.0
  %117 = vmatpush1.msra.mxu0 0.0
  %118 = vmatprep.subr.mxu0 0.0
  %119 = vmatpush1.msra.mxu0 0.0
  %120 = vmatprep.subr.mxu0 0.0
  %121 = vmatpush1.msra.mxu0 0.0
  %122 = vmatprep.subr.mxu0 0.0
  %123 = vmatpush1.msra.mxu0 0.0
  %124 = vmatprep.subr.mxu0 0.0
  %125 = vmatpush1.msra.mxu0 0.0
  %126 = vmatprep.subr.mxu0 0.0
  %127 = vmatpush1.msra.mxu0 0.0
  %128 = vmatprep.subr.mxu0 0.0
  %129 = vmatpush1.msra.mxu0 0.0
  %130 = vmatprep.mubr.f32.mxu0 0.0
  %131 = vmatmul.mubr.f32.gmra.mrb[0].mxu0 %v20
  %v132 = vpop.f32.mrb[0].mxu0
  %v133 = vadd.f32 %v59, %v132
  %v134 = vpop.f32.mrb[0].mxu0
  %v135 = vadd.f32 %v63, %v134
  %136 = vmatprep.mubr.f32.mxu0 0.0
  %137 = vmatmul.mubr.f32.gmra.mrb[0].mxu0 %v21
  %v138 = vpop.f32.mrb[0].mxu0
  %v139 = vadd.f32 %v59, %v138
  %v140 = vpop.f32.mrb[0].mxu0
  %v141 = vadd.f32 %v63, %v140
  %142 = vdwg.mxu0
  %v143 = vtanh.pop %v133
  %v144 = vtanh.pop %v135
  %v145 = vtanh.pop %v139
  %v146 = vtanh.pop %v141
  %v147 = vld [vmem:[%s3] sm:$0xff]
  %v148 = vld [vmem:[%s3 + $0x8] sm:$0xff]
  %v149 = vld [vmem:[%s3 + $0x10] sm:$0xff]
  %v150 = vld [vmem:[%s3 + $0x18] sm:$0xff]
  %v151 = vld [vmem:[%s3 + $0x20] sm:$0xff]
  %v152 = vld [vmem:[%s3 + $0x28] sm:$0xff]
  %v153 = vld [vmem:[%s3 + $0x30] sm:$0xff]
  %v154 = vld [vmem:[%s3 + $0x38] sm:$0xff]
  %v155 = vld [vmem:[%s3 + $0x40] sm:$0xff]
  %v156 = vld [vmem:[%s3 + $0x48] sm:$0xff]
  %v157 = vld [vmem:[%s3 + $0x50] sm:$0xff]
  %v158 = vld [vmem:[%s3 + $0x58] sm:$0xff]
  %v159 = vld [vmem:[%s3 + $0x60] sm:$0xff]
  %v160 = vld [vmem:[%s3 + $0x68] sm:$0xff]
  %v161 = vld [vmem:[%s3 + $0x70] sm:$0xff]
  %v162 = vld [vmem:[%s3 + $0x78] sm:$0xff]
  %v163 = vld [vmem:[%s3 + $0x80] sm:$0xff]
  %v164 = vld [vmem:[%s3 + $0x88] sm:$0xff]
  %v165 = vld [vmem:[%s3 + $0x90] sm:$0xff]
  %v166 = vld [vmem:[%s3 + $0x98] sm:$0xff]
  %v167 = vld [vmem:[%s3 + $0xa0] sm:$0xff]
  %v168 = vld [vmem:[%s3 + $0xa8] sm:$0xff]
  %v169 = vld [vmem:[%s3 + $0xb0] sm:$0xff]
  %v170 = vld [vmem:[%s3 + $0xb8] sm:$0xff]
  %v171 = vld [vmem:[%s3 + $0xc0] sm:$0xff]
  %v172 = vld [vmem:[%s3 + $0xc8] sm:$0xff]
  %v173 = vld [vmem:[%s3 + $0xd0] sm:$0xff]
  %v174 = vld [vmem:[%s3 + $0xd8] sm:$0xff]
  %v175 = vld [vmem:[%s4] sm:$0x1]
  %v177 = vlaneseq
  %v178 = vshrl.u32 %v177, 7
  %v179 = vsub.s32 0, %v178
  %v180 = vrot.slane %v175, %v179
  %vm182 = vcmask 785408
  %v184 = vsel %vm182, %v144, 0
  %v187 = vsel %vm182, %v146, 0
  %189 = vmatprep.subr.mxu0 0.0
  %190 = vmatpush1.msra.mxu0 %v147
  %191 = vmatprep.subr.mxu0 0.0
  %192 = vmatpush1.msra.mxu0 %v148
  %193 = vmatprep.subr.mxu0 0.0
  %194 = vmatpush1.msra.mxu0 %v149
  %195 = vmatprep.subr.mxu0 0.0
  %196 = vmatpush1.msra.mxu0 %v150
  %197 = vmatprep.subr.mxu0 0.0
  %198 = vmatpush1.msra.mxu0 %v151
  %199 = vmatprep.subr.mxu0 0.0
  %200 = vmatpush1.msra.mxu0 %v152
  %201 = vmatprep.subr.mxu0 0.0
  %202 = vmatpush1.msra.mxu0 %v153
  %203 = vmatprep.subr.mxu0 0.0
  %204 = vmatpush1.msra.mxu0 %v154
  %205 = vmatprep.subr.mxu0 0.0
  %206 = vmatpush1.msra.mxu0 %v155
  %207 = vmatprep.subr.mxu0 0.0
  %208 = vmatpush1.msra.mxu0 %v156
  %209 = vmatprep.subr.mxu0 0.0
  %210 = vmatpush1.msra.mxu0 %v157
  %211 = vmatprep.subr.mxu0 0.0
  %212 = vmatpush1.msra.mxu0 %v158
  %213 = vmatprep.subr.mxu0 0.0
  %214 = vmatpush1.msra.mxu0 %v159
  %215 = vmatprep.subr.mxu0 0.0
  %216 = vmatpush1.msra.mxu0 %v160
  %217 = vmatprep.subr.mxu0 0.0
  %218 = vmatpush1.msra.mxu0 %v161
  %219 = vmatprep.subr.mxu0 0.0
  %220 = vmatpush1.msra.mxu0 %v162
  %221 = vmatprep.subr.mxu0 0.0
  %222 = vmatpush1.msra.mxu0 %v163
  %223 = vmatprep.subr.mxu0 0.0
  %224 = vmatpush1.msra.mxu0 %v164
  %225 = vmatprep.subr.mxu0 0.0
  %226 = vmatpush1.msra.mxu0 %v165
  %227 = vmatprep.subr.mxu0 0.0
  %228 = vmatpush1.msra.mxu0 %v166
  %229 = vmatprep.subr.mxu0 0.0
  %230 = vmatpush1.msra.mxu0 %v167
  %231 = vmatprep.subr.mxu0 0.0
  %232 = vmatpush1.msra.mxu0 %v168
  %233 = vmatprep.subr.mxu0 0.0
  %234 = vmatpush1.msra.mxu0 %v169
  %235 = vmatprep.subr.mxu0 0.0
  %236 = vmatpush1.msra.mxu0 %v170
  %237 = vmatprep.subr.mxu0 0.0
  %238 = vmatpush1.msra.mxu0 %v171
  %239 = vmatprep.subr.mxu0 0.0
  %240 = vmatpush1.msra.mxu0 %v172
  %241 = vmatprep.subr.mxu0 0.0
  %242 = vmatpush1.msra.mxu0 %v173
  %243 = vmatprep.subr.mxu0 0.0
  %244 = vmatpush1.msra.mxu0 %v174
  %245 = vmatprep.subr.mxu0 0.0
  %246 = vmatpush1.msra.mxu0 0.0
  %247 = vmatprep.subr.mxu0 0.0
  %248 = vmatpush1.msra.mxu0 0.0
  %249 = vmatprep.subr.mxu0 0.0
  %250 = vmatpush1.msra.mxu0 0.0
  %251 = vmatprep.subr.mxu0 0.0
  %252 = vmatpush1.msra.mxu0 0.0
  %253 = vmatprep.mubr.f32.mxu0 %v184
  %254 = vmatmul.mubr.f32.gmra.mrb[0].mxu0 %v143
  %v255 = vpop.f32.mrb[0].mxu0
  %v256 = vadd.f32 %v180, %v255
  %v257 = vpop.f32.mrb[0].mxu0
  %258 = vmatprep.mubr.f32.mxu0 %v187
  %259 = vmatmul.mubr.f32.gmra.mrb[0].mxu0 %v145
  %v260 = vpop.f32.mrb[0].mxu0
  %v261 = vadd.f32 %v180, %v260
  %v262 = vpop.f32.mrb[0].mxu0
  %263 = vdwg.mxu0
  %vm264 = vcmask 326656
  %265 = vst.msk [vmem:[%s5] sm:$0xff] %vm264, %v256
  %vm266 = vcmask 320512
  %267 = vst.msk [vmem:[%s5 + $0x8] sm:$0x3] %vm266, %v261
  // Predicated region
  $region22: #{decoder_forward.3} parent=0 // pred_check
    _
  $region23: #{decoder_forward.3} parent=0 // pred_check_branch
    %269 = sbr.rel (0) target = $region25
  $region24: #{decoder_forward.3} parent=0 // pred_region
    _
  $region25: #{decoder_forward.3} parent=0 // pred_fallthru
    _
  // Predicated region
  $region26: #{decoder_forward.3} parent=0 // pred_check
    _
  $region27: #{decoder_forward.3} parent=0 // pred_check_branch
    %271 = sbr.rel (0) target = $region29
  $region28: #{decoder_forward.3} parent=0 // pred_region
    _
  $region29: #{decoder_forward.3} parent=0 // pred_fallthru
    _

// kernel: decoder_forward.2
$region0: #{decoder_forward.2}
  #allocation0 [shape = 'u32[]', space=smem, size = 0x4, offset = 0x4, fixed_abs, tag = 'smem constant byte address 0x4 - core index']
  #allocation1 [shape = 'u32[144,128]{1,0:T(1,128)}', space=vmem, size = 0x12000, scoped, tag = 'internal scratch']
  #allocation2 [shape = 'f32[2,2,32]{2,1,0:T(2,128)}', space=vmem, size = 0x800, scoped, tag = 'scratch operand']
  #allocation3 [shape = 'f32[2,2,32]{2,1,0:T(2,128)}', space=vmem, size = 0x800, scoped, tag = 'scratch operand']
  %s0 = inlined_call_operand.vmem [shape: f32[2,5,16], index: 0, kind: input, shape index: {}]
  %s1 = inlined_call_operand.vmem [shape: f32[2,8,24], index: 1, kind: input, shape index: {}]
  %s2 = inlined_call_operand.vmem [shape: f32[2,8], index: 2, kind: input, shape index: {}]
  %s3 = inlined_call_operand.vmem [shape: f32[2,2,32], index: 3, kind: input, shape index: {}]
  %s4 = inlined_call_operand.vmem [shape: f32[2,2,32], index: 4, kind: input, shape index: {}]
  %s5 = inlined_call_operand.vmem [shape: f32[2,8,32], index: 5, kind: input, shape index: {}]
  %s6 = inlined_call_operand.vmem [shape: f32[72,128], index: 6, kind: input, shape index: {}]
  %s7 = inlined_call_operand.vmem [shape: f32[1,128], index: 7, kind: input, shape index: {}]
  %s8 = inlined_call_operand.vmem [shape: f32[64,128], index: 8, kind: input, shape index: {}]
  %s9 = inlined_call_operand.vmem [shape: f32[1,128], index: 9, kind: input, shape index: {}]
  %s10 = inlined_call_operand.vmem [shape: f32[2,5,128], index: 10, kind: output, shape index: {}]
  %s11 = sld [smem:[#allocation0]]
  $region57: #{decoder_forward.2} parent=0
    _
  %s13 = ssub.s32 1, %s11
  %s14 = scalar_select 0, %s13, %s11
  // Predicated region
  $region2: #{decoder_forward.2} parent=0 // pred_check
    _
  $region3: #{decoder_forward.2} parent=0 // pred_check_branch
    %16 = sbr.rel (0) target = $region5
  $region4: #{decoder_forward.2} parent=0 // pred_region
    _
  $region5: #{decoder_forward.2} parent=0 // pred_fallthru
    _
  // Predicated region
  $region6: #{decoder_forward.2} parent=0 // pred_check
    _
  $region7: #{decoder_forward.2} parent=0 // pred_check_branch
    %18 = sbr.rel (0) target = $region9
  $region8: #{decoder_forward.2} parent=0 // pred_region
    _
  $region9: #{decoder_forward.2} parent=0 // pred_fallthru
    _
  // Predicated region
  $region10: #{decoder_forward.2} parent=0 // pred_check
    _
  $region11: #{decoder_forward.2} parent=0 // pred_check_branch
    %20 = sbr.rel (0) target = $region13
  $region12: #{decoder_forward.2} parent=0 // pred_region
    _
  $region13: #{decoder_forward.2} parent=0 // pred_fallthru
    _
  // Predicated region
  $region14: #{decoder_forward.2} parent=0 // pred_check
    _
  $region15: #{decoder_forward.2} parent=0 // pred_check_branch
    %22 = sbr.rel (0) target = $region17
  $region16: #{decoder_forward.2} parent=0 // pred_region
    _
  $region17: #{decoder_forward.2} parent=0 // pred_fallthru
    _
  // Predicated region
  $region18: #{decoder_forward.2} parent=0 // pred_check
    _
  $region19: #{decoder_forward.2} parent=0 // pred_check_branch
    %24 = sbr.rel (0) target = $region21
  $region20: #{decoder_forward.2} parent=0 // pred_region
    _
  $region21: #{decoder_forward.2} parent=0 // pred_fallthru
    _
  // Predicated region
  $region22: #{decoder_forward.2} parent=0 // pred_check
    _
  $region23: #{decoder_forward.2} parent=0 // pred_check_branch
    %26 = sbr.rel (0) target = $region25
  $region24: #{decoder_forward.2} parent=0 // pred_region
    _
  $region25: #{decoder_forward.2} parent=0 // pred_fallthru
    _
  // Predicated region
  $region26: #{decoder_forward.2} parent=0 // pred_check
    _
  $region27: #{decoder_forward.2} parent=0 // pred_check_branch
    %28 = sbr.rel (0) target = $region29
  $region28: #{decoder_forward.2} parent=0 // pred_region
    _
  $region29: #{decoder_forward.2} parent=0 // pred_fallthru
    _
  // Predicated region
  $region30: #{decoder_forward.2} parent=0 // pred_check
    _
  $region31: #{decoder_forward.2} parent=0 // pred_check_branch
    %30 = sbr.rel (0) target = $region33
  $region32: #{decoder_forward.2} parent=0 // pred_region
    _
  $region33: #{decoder_forward.2} parent=0 // pred_fallthru
    _
  // Predicated region
  $region34: #{decoder_forward.2} parent=0 // pred_check
    _
  $region35: #{decoder_forward.2} parent=0 // pred_check_branch
    %32 = sbr.rel (0) target = $region37
  $region36: #{decoder_forward.2} parent=0 // pred_region
    _
  $region37: #{decoder_forward.2} parent=0 // pred_fallthru
    _
  // Predicated region
  $region38: #{decoder_forward.2} parent=0 // pred_check
    _
  $region39: #{decoder_forward.2} parent=0 // pred_check_branch
    %34 = sbr.rel (0) target = $region41
  $region40: #{decoder_forward.2} parent=0 // pred_region
    _
  $region41: #{decoder_forward.2} parent=0 // pred_fallthru
    _
  %v35 = vld [vmem:[%s3] sm:$0x3]
  %v36 = vld [vmem:[%s3 + $0x2] sm:$0x3]
  %vm37 = vcmask 254976
  %38 = vst.msk [vmem:[#allocation2] sm:$0x3] %vm37, %v35
  %39 = vst.msk [vmem:[#allocation2 + $0x2] sm:$0x3] %vm37, %v36
  %v40 = vld [vmem:[%s4] sm:$0x3]
  %v41 = vld [vmem:[%s4 + $0x2] sm:$0x3]
  %42 = vst.msk [vmem:[#allocation3] sm:$0x3] %vm37, %v40
  %43 = vst.msk [vmem:[#allocation3 + $0x2] sm:$0x3] %vm37, %v41
  %v44 = vld [vmem:[%s1] sm:$0xff]
  %v45 = vld [vmem:[%s1 + $0x8] sm:$0xff]
  %v46 = vld [vmem:[%s5] sm:$0xff]
  %v47 = vld [vmem:[%s5 + $0x8] sm:$0xff]
  %v48 = vld [vmem:[%s6] sm:$0xff]
  %v49 = vld [vmem:[%s6 + $0x8] sm:$0xff]
  %v50 = vld [vmem:[%s6 + $0x10] sm:$0xff]
  %v51 = vld [vmem:[%s6 + $0x18] sm:$0xff]
  %v52 = vld [vmem:[%s6 + $0x20] sm:$0xff]
  %v53 = vld [vmem:[%s6 + $0x28] sm:$0xff]
  %v54 = vld [vmem:[%s6 + $0x30] sm:$0xff]
  %v55 = vld [vmem:[%s6 + $0x38] sm:$0xff]
  %v56 = vld [vmem:[%s6 + $0x40] sm:$0xff]
  %v57 = vld [vmem:[%s8] sm:$0xff]
  %v58 = vld [vmem:[%s8 + $0x8] sm:$0xff]
  %v59 = vld [vmem:[%s8 + $0x10] sm:$0xff]
  %v60 = vld [vmem:[%s8 + $0x18] sm:$0xff]
  %v61 = vld [vmem:[%s8 + $0x20] sm:$0xff]
  %v62 = vld [vmem:[%s8 + $0x28] sm:$0xff]
  %v63 = vld [vmem:[%s8 + $0x30] sm:$0xff]
  %v64 = vld [vmem:[%s8 + $0x38] sm:$0xff]
  %v65 = vld [vmem:[%s7] sm:$0x1]
  %v67 = vlaneseq
  %v68 = vshrl.u32 %v67, 7
  %v69 = vsub.s32 0, %v68
  %v70 = vrot.slane %v65, %v69
  %v72 = vld [vmem:[%s9] sm:$0x1]
  %v74 = vlaneseq
  %v75 = vshrl.u32 %v74, 7
  %v76 = vsub.s32 0, %v75
  %v77 = vrot.slane %v72, %v76
  %v79 = vld [vmem:[%s2] sm:$0x3]
  %vm80 = vcmp.gt.f32.partialorder %v79, 0.0
  %v81 = vsel %vm80, 0.0, -1e+30
  loop: start=0, step=1, limit=5
  $region42: #{decoder_forward.2} parent=0 // loop_pre_header
    _
  $region43: #{decoder_forward.2} parent=0 // loop_header
    %s83 = sphi 0, %s87
    %p84 = scmp.ge.s32.totalorder %s83, 5
  $region44: #{decoder_forward.2} parent=0 // loop_header_branch
    %86 = sbr.rel (%p84) target = $region48
  $region45: #{decoder_forward.2} parent=0 // loop_body
    %v88 = vld [vmem:[#allocation2] sm:$0x3]
    %s89 = scalar_lea.vmem [#allocation2], 2
    %v90 = vld [vmem:[%s89] sm:$0x3]
    %v93 = vunpack.c.l.s4 1966171168
    %v94 = vunpack.c.0.s8 %v93
    %v95 = vlaneseq
    %v96 = vshrl.u32 %v95, 7
    %v97 = vsub.s32 %v94, %v96
    %v98 = vrot.slane %v90, %v97
    %v99 = vcombine.high %v98, %v98
    %v101 = vunpack.c.l.s4 1966171168
    %v102 = vunpack.c.0.s8 %v101
    %v103 = vlaneseq
    %v104 = vshrl.u32 %v103, 7
    %v105 = vsub.s32 %v102, %v104
    %v106 = vrot.slane %v98, %v105
    %v108 = vunpack.c.l.s4 1966171168
    %v109 = vunpack.c.0.s8 %v108
    %v110 = vlaneseq
    %v111 = vshrl.u32 %v110, 7
    %v112 = vsub.s32 %v109, %v111
    %v113 = vrot.slane %v99, %v112
    %v114 = vlaneseq
    %v115 = vshrl.u32 %v114, 7
    %v116 = vsub.s32 0, %v115
    %v117 = vrot.slane %v106, %v116
    %v118 = vlaneseq
    %v119 = vshrl.u32 %v118, 7
    %v120 = vsub.s32 0, %v119
    %v121 = vrot.slane %v113, %v120
    %v124 = vmul.f32 %v117, %v46
    %v125 = vmul.f32 %v121, %v47
    %vm126 = vcmask 261120
    %v127 = vsel %vm126, %v124, 0.0
    %128 = vadd.xlane.f32.xlu0 %v127
    %v129 = vpop.xlane.xlu0 %128
    %v130 = vsel %vm126, %v125, 0.0
    %131 = vadd.xlane.f32.xlu0 %v130
    %v132 = vpop.xlane.xlu0 %131
    %v134 = vlaneseq
    %v135 = vshrl.u32 %v134, 7
    %v136 = vsub.s32 0, %v135
    %v137 = vrot.slane %v81, %v136
    %139 = vbcast.lane.b32.xlu0 %v137, 256
    %v140 = vpop.permute.xlu0 %139
    %v141 = vlaneseq
    %v142 = vshrl.u32 %v141, 7
    %v143 = vsub.s32 1, %v142
    %v144 = vrot.slane %v81, %v143
    %146 = vbcast.lane.b32.xlu0 %v144, 256
    %v147 = vpop.permute.xlu0 %146
    %v150 = vadd.f32 %v129, %v140
    %v151 = vadd.f32 %v132, %v147
    %154 = vset.pattern.permute.xlu0 0
    %155 = vperm.xlu0 %154, %v150
    %v156 = vpop.permute.xlu0 %155
    %157 = vset.pattern.permute.xlu0 0
    %158 = vperm.xlu0 %157, %v151
    %v159 = vpop.permute.xlu0 %158
    %v160 = vlaneseq
    %v161 = vand.u32 %v160, 127
    %v162 = vlaneseq
    %v163 = vshrl.u32 %v162, 7
    %v164 = vsub.s32 %v161, %v163
    %v165 = vrot.slane %v156, %v164
    %v166 = vlaneseq
    %v167 = vshrl.u32 %v166, 7
    %v168 = vsub.s32 %v161, %v167
    %v169 = vrot.slane %v159, %v168
    %vm170 = vcmask 1041409
    %v171 = vsel %vm170, %v169, %v165
    %vm173 = vcmask 58368
    %v174 = vsel %vm173, %v171, -inf
    %175 = vmax.xlane.f32.xlu0 %v174
    %v176 = vpop.xlane.xlu0 %175
    %v178 = vlaneseq
    %v179 = vshrl.u32 %v178, 7
    %v180 = vsub.s32 0, %v179
    %v181 = vrot.slane %v176, %v180
    %v182 = vlaneseq
    %v183 = vshrl.u32 %v182, 7
    %v184 = vsub.s32 1, %v183
    %v185 = vrot.slane %v176, %v184
    %v188 = vsub.f32 %v150, %v181
    %v189 = vsub.f32 %v151, %v185
    %v190 = vmul.f32 %v188, 1.442695
    %v191 = vpow.pop %v190
    %v192 = vmul.f32 %v189, 1.442695
    %v193 = vpow.pop %v192
    %196 = vset.pattern.permute.xlu0 0
    %197 = vperm.xlu0 %196, %v191
    %v198 = vpop.permute.xlu0 %197
    %199 = vset.pattern.permute.xlu0 0
    %200 = vperm.xlu0 %199, %v193
    %v201 = vpop.permute.xlu0 %200
    %v202 = vlaneseq
    %v203 = vshrl.u32 %v202, 7
    %v204 = vsub.s32 %v161, %v203
    %v205 = vrot.slane %v198, %v204
    %v206 = vlaneseq
    %v207 = vshrl.u32 %v206, 7
    %v208 = vsub.s32 %v161, %v207
    %v209 = vrot.slane %v201, %v208
    %v210 = vsel %vm170, %v209, %v205
    %v212 = vsel %vm173, %v210, 0.0
    %213 = vadd.xlane.f32.xlu0 %v212
    %v214 = vpop.xlane.xlu0 %213
    %v215 = vrcp.pop %v214
    %v217 = vlaneseq
    %v218 = vshrl.u32 %v217, 7
    %v219 = vsub.s32 0, %v218
    %v220 = vrot.slane %v215, %v219
    %v221 = vlaneseq
    %v222 = vshrl.u32 %v221, 7
    %v223 = vsub.s32 1, %v222
    %v224 = vrot.slane %v215, %v223
    %v227 = vmul.f32 %v191, %v220
    %v228 = vmul.f32 %v193, %v224
    %230 = vset.pattern.permute.xlu0 0
    %231 = vperm.xlu0 %230, %v227
    %v232 = vpop.permute.xlu0 %231
    %235 = vset.pattern.permute.xlu0 0
    %236 = vperm.xlu0 %235, %v228
    %v237 = vpop.permute.xlu0 %236
    %v239 = vmul.f32 %v232, %v44
    %v240 = vmul.f32 %v237, %v45
    %vm241 = vcmask 195584
    %v242 = vsel %vm241, %v239, 0.0
    %v243 = vrot.slane %v242, 4
    %v244 = vadd.f32 %v242, %v243
    %v245 = vrot.slane %v244, 2
    %v246 = vadd.f32 %v244, %v245
    %v247 = vrot.slane %v246, 1
    %v248 = vadd.f32 %v246, %v247
    %v249 = vsel %vm241, %v240, 0.0
    %v250 = vrot.slane %v249, 4
    %v251 = vadd.f32 %v249, %v250
    %v252 = vrot.slane %v251, 2
    %v253 = vadd.f32 %v251, %v252
    %v254 = vrot.slane %v253, 1
    %v255 = vadd.f32 %v253, %v254
    %s256 = scalar_lea.vmem %s0, %s83
    %v257 = vld [vmem:[%s256] sm:$0x1]
    %v258 = vld [vmem:[%s256 + $0x8] sm:$0x1]
    %v261 = vrot.slane %v258, 7
    %v262 = vsel %vm170, %v261, %v257
    %v266 = vsel %vm170, %v255, %v248
    %267 = vrot.lane.b32.xlu0 %v266, 16
    %v268 = vpop.permute.xlu0 %267
    %271 = vrot.lane.b32.xlu0 %v88, 40
    %v272 = vpop.permute.xlu0 %271
    %vm274 = vcmask 130048
    %v275 = vsel %vm274, %v262, %v268
    %vm276 = vcmask 326656
    %v277 = vsel %vm276, %v275, %v272
    %vm278 = vcmask 588800
    %v280 = vsel %vm278, %v277, 0
    %282 = vmatprep.subr.mxu0 0.0
    %283 = vmatpush1.msra.mxu0 %v48
    %284 = vmatprep.subr.mxu0 0.0
    %285 = vmatpush1.msra.mxu0 %v49
    %286 = vmatprep.subr.mxu0 0.0
    %287 = vmatpush1.msra.mxu0 %v50
    %288 = vmatprep.subr.mxu0 0.0
    %289 = vmatpush1.msra.mxu0 %v51
    %290 = vmatprep.subr.mxu0 0.0
    %291 = vmatpush1.msra.mxu0 %v52
    %292 = vmatprep.subr.mxu0 0.0
    %293 = vmatpush1.msra.mxu0 %v53
    %294 = vmatprep.subr.mxu0 0.0
    %295 = vmatpush1.msra.mxu0 %v54
    %296 = vmatprep.subr.mxu0 0.0
    %297 = vmatpush1.msra.mxu0 %v55
    %298 = vmatprep.subr.mxu0 0.0
    %299 = vmatpush1.msra.mxu0 %v56
    %300 = vmatprep.subr.mxu0 0.0
    %301 = vmatpush1.msra.mxu0 0.0
    %302 = vmatprep.subr.mxu0 0.0
    %303 = vmatpush1.msra.mxu0 0.0
    %304 = vmatprep.subr.mxu0 0.0
    %305 = vmatpush1.msra.mxu0 0.0
    %306 = vmatprep.subr.mxu0 0.0
    %307 = vmatpush1.msra.mxu0 0.0
    %308 = vmatprep.subr.mxu0 0.0
    %309 = vmatpush1.msra.mxu0 0.0
    %310 = vmatprep.subr.mxu0 0.0
    %311 = vmatpush1.msra.mxu0 0.0
    %312 = vmatprep.subr.mxu0 0.0
    %313 = vmatpush1.msra.mxu0 0.0
    %314 = vmatprep.subr.mxu0 0.0
    %315 = vmatpush1.msra.mxu0 0.0
    %316 = vmatprep.subr.mxu0 0.0
    %317 = vmatpush1.msra.mxu0 0.0
    %318 = vmatprep.subr.mxu0 0.0
    %319 = vmatpush1.msra.mxu0 0.0
    %320 = vmatprep.subr.mxu0 0.0
    %321 = vmatpush1.msra.mxu0 0.0
    %322 = vmatprep.subr.mxu0 0.0
    %323 = vmatpush1.msra.mxu0 0.0
    %324 = vmatprep.subr.mxu0 0.0
    %325 = vmatpush1.msra.mxu0 0.0
    %326 = vmatprep.subr.mxu0 0.0
    %327 = vmatpush1.msra.mxu0 0.0
    %328 = vmatprep.subr.mxu0 0.0
    %329 = vmatpush1.msra.mxu0 0.0
    %330 = vmatprep.subr.mxu0 0.0
    %331 = vmatpush1.msra.mxu0 0.0
    %332 = vmatprep.subr.mxu0 0.0
    %333 = vmatpush1.msra.mxu0 0.0
    %334 = vmatprep.subr.mxu0 0.0
    %335 = vmatpush1.msra.mxu0 0.0
    %336 = vmatprep.subr.mxu0 0.0
    %337 = vmatpush1.msra.mxu0 0.0
    %338 = vmatprep.subr.mxu0 0.0
    %339 = vmatpush1.msra.mxu0 0.0
    %340 = vmatprep.subr.mxu0 0.0
    %341 = vmatpush1.msra.mxu0 0.0
    %342 = vmatprep.subr.mxu0 0.0
    %343 = vmatpush1.msra.mxu0 0.0
    %344 = vmatprep.subr.mxu0 0.0
    %345 = vmatpush1.msra.mxu0 0.0
    %346 = vmatprep.mubr.f32.mxu0 0.0
    %347 = vmatmul.mubr.f32.gmra.mrb[0].mxu0 %v280
    %v348 = vpop.f32.mrb[0].mxu0
    %v349 = vadd.f32 %v70, %v348
    %v350 = vpop.f32.mrb[0].mxu0
    %351 = vdwg.mxu0
    %v352 = vxor.u32 %v349, 2147483648
    %v353 = vmul.f32 %v352, 1.442695
    %v354 = vpow.pop %v353
    %v355 = vadd.f32 %v354, 1.0
    %v356 = vrcp.pop %v355
    %v357 = vmul.f32 1.0, %v356
    %v358 = vtanh.pop %v349
    %v359 = vld [vmem:[#allocation3] sm:$0x3]
    %361 = vrot.lane.b32.xlu0 %v359, 32
    %v362 = vpop.permute.xlu0 %361
    %v364 = vmul.f32 %v357, %v362
    %366 = vrot.lane.b32.xlu0 %v358, 64
    %v367 = vpop.permute.xlu0 %366
    %v369 = vmul.f32 %v357, %v367
    %371 = vrot.lane.b32.xlu0 %v369, 32
    %v372 = vpop.permute.xlu0 %371
    %v374 = vadd.f32 %v364, %v372
    %v375 = vtanh.pop %v374
    %377 = vrot.lane.b32.xlu0 %v375, 64
    %v378 = vpop.permute.xlu0 %377
    %v380 = vmul.f32 %v357, %v378
    %382 = vrot.lane.b32.xlu0 %v380, 32
    %v383 = vpop.permute.xlu0 %382
    %385 = vrot.lane.b32.xlu0 %v90, 32
    %v386 = vpop.permute.xlu0 %385
    %v388 = vsel %vm126, %v383, %v386
    %vm389 = vcmask 523264
    %v391 = vsel %vm389, %v388, 0
    %393 = vmatprep.subr.mxu0 0.0
    %394 = vmatpush1.msra.mxu0 %v57
    %395 = vmatprep.subr.mxu0 0.0
    %396 = vmatpush1.msra.mxu0 %v58
    %397 = vmatprep.subr.mxu0 0.0
    %398 = vmatpush1.msra.mxu0 %v59
    %399 = vmatprep.subr.mxu0 0.0
    %400 = vmatpush1.msra.mxu0 %v60
    %401 = vmatprep.subr.mxu0 0.0
    %402 = vmatpush1.msra.mxu0 %v61
    %403 = vmatprep.subr.mxu0 0.0
    %404 = vmatpush1.msra.mxu0 %v62
    %405 = vmatprep.subr.mxu0 0.0
    %406 = vmatpush1.msra.mxu0 %v63
    %407 = vmatprep.subr.mxu0 0.0
    %408 = vmatpush1.msra.mxu0 %v64
    %409 = vmatprep.subr.mxu0 0.0
    %410 = vmatpush1.msra.mxu0 0.0
    %411 = vmatprep.subr.mxu0 0.0
    %412 = vmatpush1.msra.mxu0 0.0
    %413 = vmatprep.subr.mxu0 0.0
    %414 = vmatpush1.msra.mxu0 0.0
    %415 = vmatprep.subr.mxu0 0.0
    %416 = vmatpush1.msra.mxu0 0.0
    %417 = vmatprep.subr.mxu0 0.0
    %418 = vmatpush1.msra.mxu0 0.0
    %419 = vmatprep.subr.mxu0 0.0
    %420 = vmatpush1.msra.mxu0 0.0
    %421 = vmatprep.subr.mxu0 0.0
    %422 = vmatpush1.msra.mxu0 0.0
    %423 = vmatprep.subr.mxu0 0.0
    %424 = vmatpush1.msra.mxu0 0.0
    %425 = vmatprep.subr.mxu0 0.0
    %426 = vmatpush1.msra.mxu0 0.0
    %427 = vmatprep.subr.mxu0 0.0
    %428 = vmatpush1.msra.mxu0 0.0
    %429 = vmatprep.subr.mxu0 0.0
    %430 = vmatpush1.msra.mxu0 0.0
    %431 = vmatprep.subr.mxu0 0.0
    %432 = vmatpush1.msra.mxu0 0.0
    %433 = vmatprep.subr.mxu0 0.0
    %434 = vmatpush1.msra.mxu0 0.0
    %435 = vmatprep.subr.mxu0 0.0
    %436 = vmatpush1.msra.mxu0 0.0
    %437 = vmatprep.subr.mxu0 0.0
    %438 = vmatpush1.msra.mxu0 0.0
    %439 = vmatprep.subr.mxu0 0.0
    %440 = vmatpush1.msra.mxu0 0.0
    %441 = vmatprep.subr.mxu0 0.0
    %442 = vmatpush1.msra.mxu0 0.0
    %443 = vmatprep.subr.mxu0 0.0
    %444 = vmatpush1.msra.mxu0 0.0
    %445 = vmatprep.subr.mxu0 0.0
    %446 = vmatpush1.msra.mxu0 0.0
    %447 = vmatprep.subr.mxu0 0.0
    %448 = vmatpush1.msra.mxu0 0.0
    %449 = vmatprep.subr.mxu0 0.0
    %450 = vmatpush1.msra.mxu0 0.0
    %451 = vmatprep.subr.mxu0 0.0
    %452 = vmatpush1.msra.mxu0 0.0
    %453 = vmatprep.subr.mxu0 0.0
    %454 = vmatpush1.msra.mxu0 0.0
    %455 = vmatprep.subr.mxu0 0.0
    %456 = vmatpush1.msra.mxu0 0.0
    %457 = vmatprep.mubr.f32.mxu0 0.0
    %458 = vmatmul.mubr.f32.gmra.mrb[0].mxu0 %v391
    %v459 = vpop.f32.mrb[0].mxu0
    %v460 = vadd.f32 %v77, %v459
    %v461 = vpop.f32.mrb[0].mxu0
    %462 = vdwg.mxu0
    %v463 = vxor.u32 %v460, 2147483648
    %v464 = vmul.f32 %v463, 1.442695
    %v465 = vpow.pop %v464
    %v466 = vadd.f32 %v465, 1.0
    %v467 = vrcp.pop %v466
    %v468 = vmul.f32 1.0, %v467
    %v469 = vtanh.pop %v460
    %s470 = scalar_lea.vmem [#allocation3], 2
    %v471 = vld [vmem:[%s470] sm:$0x3]
    %473 = vrot.lane.b32.xlu0 %v471, 32
    %v474 = vpop.permute.xlu0 %473
    %v476 = vmul.f32 %v468, %v474
    %478 = vrot.lane.b32.xlu0 %v469, 64
    %v479 = vpop.permute.xlu0 %478
    %v481 = vmul.f32 %v468, %v479
    %483 = vrot.lane.b32.xlu0 %v481, 32
    %v484 = vpop.permute.xlu0 %483
    %v486 = vadd.f32 %v476, %v484
    %v487 = vtanh.pop %v486
    %489 = vrot.lane.b32.xlu0 %v487, 64
    %v490 = vpop.permute.xlu0 %489
    %v492 = vmul.f32 %v468, %v490
    %493 = vst.msk [vmem:[#allocation2] sm:$0x3] %vm37, %v383
    %495 = vrot.lane.b32.xlu0 %v374, 96
    %v496 = vpop.permute.xlu0 %495
    %498 = vst.msk [vmem:[#allocation3] sm:$0x3] %vm37, %v496
    %500 = vrot.lane.b32.xlu0 %v492, 32
    %v501 = vpop.permute.xlu0 %500
    %503 = vst.msk [vmem:[%s89] sm:$0x3] %vm37, %v501
    %505 = vrot.lane.b32.xlu0 %v486, 96
    %v506 = vpop.permute.xlu0 %505
    %508 = vst.msk [vmem:[%s470] sm:$0x3] %vm37, %v506
    %509 = vrot.lane.b32.xlu0 %v266, 32
    %v510 = vpop.permute.xlu0 %509
    %512 = vrot.lane.b32.xlu0 %v262, 56
    %v513 = vpop.permute.xlu0 %512
    %v515 = vadd.s32 %v161, 4294967224
    %v516 = vlaneseq
    %v517 = vshrl.u32 %v516, 7
    %v518 = vsub.s32 %v515, %v517
    %v519 = vrot.slane %v232, %v518
    %v520 = vlaneseq
    %v521 = vshrl.u32 %v520, 7
    %v522 = vsub.s32 %v515, %v521
    %v523 = vrot.slane %v237, %v522
    %v524 = vsel %vm170, %v523, %v519
    %v526 = vsel %vm126, %v501, %v510
    %vm527 = vcmask 457728
    %v528 = vsel %vm527, %v526, %v513
    %v529 = vsel %vm278, %v528, %v524
    %vm530 = vcmask 654336
    %v531 = vsel %vm530, %v529, 0.0
    %v534 = vunpack.c.l.s4 1966171168
    %v535 = vunpack.c.0.s8 %v534
    %v536 = vlaneseq
    %v537 = vshrl.u32 %v536, 7
    %v538 = vsub.s32 %v535, %v537
    %v539 = vrot.slane %v531, %v538
    %v540 = vcombine.high %v539, %v539
    %v542 = vunpack.c.l.s4 1966171168
    %v543 = vunpack.c.0.s8 %v542
    %v544 = vlaneseq
    %v545 = vshrl.u32 %v544, 7
    %v546 = vsub.s32 %v543, %v545
    %v547 = vrot.slane %v539, %v546
    %v549 = vunpack.c.l.s4 1966171168
    %v550 = vunpack.c.0.s8 %v549
    %v551 = vlaneseq
    %v552 = vshrl.u32 %v551, 7
    %v553 = vsub.s32 %v550, %v552
    %v554 = vrot.slane %v540, %v553
    %s557 = scalar_lea.vmem %s10, %s83
    %558 = vst [vmem:[%s557] sm:$0x1] %v547
    %559 = vst [vmem:[%s557 + $0x8] sm:$0x1] %v554
  $region46: #{decoder_forward.2} parent=0 // loop_footer
    %s87 = sadd.s32 1, %s83
  $region47: #{decoder_forward.2} parent=0 // loop_footer_branch
    %82 = sbr.rel target = $region43
  $region48: #{decoder_forward.2} parent=0 // loop_exit
    _
  // Predicated region
  $region49: #{decoder_forward.2} parent=0 // pred_check
    _
  $region50: #{decoder_forward.2} parent=0 // pred_check_branch
    %561 = sbr.rel (0) target = $region52
  $region51: #{decoder_forward.2} parent=0 // pred_region
    _
  $region52: #{decoder_forward.2} parent=0 // pred_fallthru
    _
  // Predicated region
  $region53: #{decoder_forward.2} parent=0 // pred_check
    _
  $region54: #{decoder_forward.2} parent=0 // pred_check_branch
    %563 = sbr.rel (0) target = $region56
  $region55: #{decoder_forward.2} parent=0 // pred_region
    _
  $region56: #{decoder_forward.2} parent=0 // pred_fallthru
    _

</llo_original>
